<compile_context>
chip_gen: v7x
topology: tpu7x:2x2x1
jax: 0.10.0
libtpu: 0.0.40
codegen_flags: <defaults>
</compile_context>

<pallas_src>
import jax
import jax.numpy as jnp
from jax import lax
from jax.experimental import pallas as pl
from jax.experimental.pallas import tpu as pltpu

EPS = 1e-5


def _gnorm_kernel(x_ref, o_ref):
    # x_ref: (TB, rows, lanes) -- TB independent (batch, group) normalization
    # blocks; each block is all of its group_size*H*W elements, lane-dense
    # (lanes == 128) when the block size allows it.
    x = x_ref[...].astype(jnp.float32)
    n = x.shape[1] * x.shape[2]                            # static block size
    # Sublane/row partial sums first (VPU), then one small 128-lane reduce
    # (XLU) -- keeps the XLU off the critical path of a mem-bound kernel.
    row_sum = jnp.sum(x, axis=1, keepdims=True)            # (TB, 1, lanes)
    mean = jnp.sum(row_sum, axis=2, keepdims=True) / n     # (TB, 1, 1)
    d = x - mean
    row_sq = jnp.sum(d * d, axis=1, keepdims=True)         # (TB, 1, lanes)
    var = jnp.sum(row_sq, axis=2, keepdims=True) / n       # biased variance
    inv = lax.rsqrt(var + EPS)
    o_ref[...] = (d * inv).astype(o_ref.dtype)


def _choose_tb(num_blocks, block_f32_bytes):
    """Blocks per grid step.

    Constraints:
      * 2x-in + 2x-out double buffers of the tile stay under ~24 MiB
        (f32-conservative) so it fits v7x's 32 MiB scoped VMEM with headroom.
      * Aim for >= ~512 KiB per DMA (amortize ~0.35 us/step pipeline cost).
      * Keep >= 2 grid steps (ideally >= 8) so the 'parallel' axis can be
        sharded across v7x's two TensorCores and the pipeline stays full.
    """
    budget = 24 << 20
    dma_target = 512 << 10
    best = 1
    for tb in range(1, num_blocks + 1):
        if num_blocks % tb:
            continue
        if 4 * tb * block_f32_bytes > budget:
            break
        steps = num_blocks // tb
        if steps < 2 and num_blocks >= 2:
            continue
        if steps >= 8 or tb * block_f32_bytes < dma_target:
            best = tb
    return best


def gnorm(x, group_size, donate_input=False):
    """Grouped InstanceNorm3d forward. x: (B, C, H, W). Returns (B, C, H, W)."""
    B, C, H, W = x.shape
    assert C % group_size == 0
    G = C // group_size
    nblk = B * G
    blk_elems = group_size * H * W

    # Lane-dense layout: flatten each contiguous (b, g) block into rows of 128
    # lanes (free layout plumbing). Fall back to the natural layout otherwise.
    if blk_elems % 128 == 0:
        rows, lanes = blk_elems // 128, 128
    else:
        rows, lanes = group_size * H, W

    x3 = x.reshape(nblk, rows, lanes)

    blk_f32_bytes = blk_elems * 4
    tb = _choose_tb(nblk, blk_f32_bytes)
    # TODO(synk): if even tb=1 exceeds the VMEM budget (very large
    # group_size*H*W), add a second 'arbitrary' grid axis that tiles the
    # reduction with a VMEM accumulator instead of holding the whole block.

    vmem_needed = 4 * tb * rows * lanes * x.dtype.itemsize + (4 << 20)
    vmem_limit = int(min(128 << 20, max(32 << 20, vmem_needed)))

    out3 = pl.pallas_call(
        _gnorm_kernel,
        out_shape=jax.ShapeDtypeStruct(x3.shape, x.dtype),
        grid_spec=pltpu.PrefetchScalarGridSpec(
            num_scalar_prefetch=0,
            grid=(nblk // tb,),
            in_specs=[pl.BlockSpec((tb, rows, lanes), lambda i: (i, 0, 0))],
            out_specs=pl.BlockSpec((tb, rows, lanes), lambda i: (i, 0, 0)),
        ),
        compiler_params=pltpu.CompilerParams(
            dimension_semantics=("parallel",),
            vmem_limit_bytes=vmem_limit,
        ),
        input_output_aliases={0: 0} if donate_input else {},
    )(x3)

    return out3.reshape(B, C, H, W)


def gnorm_reference(x, group_size):
    B, C, H, W = x.shape
    G = C // group_size
    xr = x.reshape(B, G, group_size, H, W).astype(jnp.float32)
    mean = xr.mean(axis=(2, 3, 4), keepdims=True)
    var = ((xr - mean) ** 2).mean(axis=(2, 3, 4), keepdims=True)
    y = (xr - mean) / jnp.sqrt(var + EPS)
    return y.reshape(B, C, H, W).astype(x.dtype)


if __name__ == "__main__":
    # Primary case: lane-dense path (group_size*H*W % 128 == 0).
    key = jax.random.PRNGKey(0)
    B, C, H, W = 2, 8, 16, 16
    group_size = 4  # width = C // group_size channels feed InstanceNorm3d(width)
    x = jax.random.normal(key, (B, C, H, W), dtype=jnp.float32)

    y = jax.block_until_ready(gnorm(x, group_size))
    y_ref = gnorm_reference(x, group_size)
    assert y.shape == (B, C, H, W)
    assert jnp.allclose(y, y_ref, atol=1e-5, rtol=1e-5), "lane-dense path mismatch"

    # Fallback case: block size not divisible by 128 lanes.
    B2, C2, H2, W2, gs2 = 2, 6, 10, 12, 3
    x2 = jax.random.normal(jax.random.PRNGKey(1), (B2, C2, H2, W2), dtype=jnp.float32)
    y2 = jax.block_until_ready(gnorm(x2, gs2))
    y2_ref = gnorm_reference(x2, gs2)
    assert jnp.allclose(y2, y2_ref, atol=1e-5, rtol=1e-5), "fallback path mismatch"

    print("KERNEL_OK")
</pallas_src>

<mosaic_0001>
module attributes {stable_mosaic.version = 11 : i64} {
  func.func @_gnorm_kernel(%arg0: i32, %arg1: memref<2x8x128xf32, #tpu.memory_space<vmem>>, %arg2: memref<2x8x128xf32, #tpu.memory_space<vmem>>) attributes {dimension_semantics = [#tpu.dimension_semantics<parallel>], iteration_bounds = array<i64: 2>, scalar_prefetch = 0 : i64, scratch_operands = 0 : i64, tpu.core_type = #tpu.core_type<tc>, window_params = [{transform_indices = @transform_0, window_bounds = array<i64: 2, 8, 128>}, {transform_indices = @transform_1, window_bounds = array<i64: 2, 8, 128>}]} {
    %c0 = arith.constant 0 : index
    %c0_0 = arith.constant 0 : index
    %c0_1 = arith.constant 0 : index
    %0 = vector.load %arg1[%c0, %c0_0, %c0_1] : memref<2x8x128xf32, #tpu.memory_space<vmem>>, vector<2x8x128xf32>
    %cst = arith.constant dense<0.000000e+00> : vector<2x128xf32>
    %1 = vector.multi_reduction <add>, %0, %cst [1] : vector<2x8x128xf32> to vector<2x128xf32>
    %2 = vector.shape_cast %1 : vector<2x128xf32> to vector<2x1x128xf32>
    %cst_2 = arith.constant dense<0.000000e+00> : vector<2x1xf32>
    %3 = vector.multi_reduction <add>, %2, %cst_2 [2] : vector<2x1x128xf32> to vector<2x1xf32>
    %4 = vector.shape_cast %3 : vector<2x1xf32> to vector<2x1x1xf32>
    %cst_3 = arith.constant 1.024000e+03 : f32
    %5 = vector.broadcast %cst_3 : f32 to vector<2x1x1xf32>
    %6 = arith.divf %4, %5 : vector<2x1x1xf32>
    %7 = vector.broadcast %6 : vector<2x1x1xf32> to vector<2x8x128xf32>
    %8 = arith.subf %0, %7 : vector<2x8x128xf32>
    %9 = arith.mulf %8, %8 : vector<2x8x128xf32>
    %cst_4 = arith.constant dense<0.000000e+00> : vector<2x128xf32>
    %10 = vector.multi_reduction <add>, %9, %cst_4 [1] : vector<2x8x128xf32> to vector<2x128xf32>
    %11 = vector.shape_cast %10 : vector<2x128xf32> to vector<2x1x128xf32>
    %cst_5 = arith.constant dense<0.000000e+00> : vector<2x1xf32>
    %12 = vector.multi_reduction <add>, %11, %cst_5 [2] : vector<2x1x128xf32> to vector<2x1xf32>
    %13 = vector.shape_cast %12 : vector<2x1xf32> to vector<2x1x1xf32>
    %cst_6 = arith.constant 1.024000e+03 : f32
    %14 = vector.broadcast %cst_6 : f32 to vector<2x1x1xf32>
    %15 = arith.divf %13, %14 : vector<2x1x1xf32>
    %cst_7 = arith.constant 9.99999974E-6 : f32
    %16 = vector.broadcast %cst_7 : f32 to vector<2x1x1xf32>
    %17 = arith.addf %15, %16 : vector<2x1x1xf32>
    %18 = math.rsqrt %17 : vector<2x1x1xf32>
    %19 = vector.broadcast %18 : vector<2x1x1xf32> to vector<2x8x128xf32>
    %20 = arith.mulf %8, %19 : vector<2x8x128xf32>
    %c0_8 = arith.constant 0 : index
    %c0_9 = arith.constant 0 : index
    %c0_10 = arith.constant 0 : index
    %21 = vector.load %arg2[%c0_8, %c0_9, %c0_10] : memref<2x8x128xf32, #tpu.memory_space<vmem>>, vector<2x8x128xf32>
    tpu.vector_store %arg2[%c0_8, %c0_9, %c0_10], %20 {strides = array<i32>} : memref<2x8x128xf32, #tpu.memory_space<vmem>>, vector<2x8x128xf32>,
    return
  }
  func.func @transform_0(%arg0: i32) -> (i32, i32, i32) {
    %c0_i32 = arith.constant 0 : i32
    %c0_i32_0 = arith.constant 0 : i32
    %c0_i32_1 = arith.constant 0 : i32
    return %arg0, %c0_i32, %c0_i32_0 : i32, i32, i32
  }
  func.func @transform_1(%arg0: i32) -> (i32, i32, i32) {
    %c0_i32 = arith.constant 0 : i32
    %c0_i32_0 = arith.constant 0 : i32
    %c0_i32_1 = arith.constant 0 : i32
    return %arg0, %c0_i32, %c0_i32_0 : i32, i32, i32
  }
}

</mosaic_0001>

<llo_original>
// kernel: tpu_custom_call.1
$region0: #{tpu_custom_call.1}
  #allocation0 [shape = 'u32[]', space=smem, size = 0x4, offset = 0x4, fixed_abs, tag = 'smem constant byte address 0x4 - core index']
  #allocation1 [shape = 'u32[144,128]{1,0:T(1,128)}', space=vmem, size = 0x12000, scoped, tag = 'internal scratch']
  %s0 = inlined_call_operand.hbm [shape: f32[4,8,128], index: 0, kind: input, shape index: {}]
  %s1 = inlined_call_operand.hbm [shape: f32[4,8,128], index: 1, kind: output, shape index: {}]
  %s2 = sld [smem:[#allocation0]]
  $region41: #{tpu_custom_call.1} parent=0
    _
  %s4 = ssub.s32 1, %s2
  %s5 = scalar_select 0, %s4, %s2
  $region1: #{tpu_custom_call.1} parent=0
    #allocation2 [shape = 'u8[16384]{0}', space=vmem, size = 0x4000, scoped, tag = 'input window, operand 0']
    #allocation3 [shape = 's32[2]{0}', space=sflag, size = 0x8, scoped, tag = 'scoped memory for tpu_custom_call.1']
    #allocation4 [shape = 's32[2]{0}', space=sflag, size = 0x8, scoped, tag = 'scoped memory for tpu_custom_call.1']
    #allocation5 [shape = 'u8[16384]{0}', space=vmem, size = 0x4000, scoped, tag = 'output window, operand 0']
    %6 = vsyncpa [#allocation3], 0
    %s7 = scalar_lea.sflag [#allocation3], 1
    %8 = vsyncpa %s7, 0
    %9 = vsyncpa [#allocation4], 0
    %s10 = scalar_lea.sflag [#allocation4], 1
    %11 = vsyncpa %s10, 0
    loop: start=0, step=1, limit=4
    $region2: #{tpu_custom_call.1} parent=1 // loop_pre_header
      _
    $region3: #{tpu_custom_call.1} parent=1 // loop_header
      %s13 = sphi 0, %s17
      %p14 = scmp.ge.s32.totalorder %s13, 4
      %s23 = sphi 0, %s25
      %s26 = sphi 0, %s23
      %s27 = sphi 0, %s26
      %s43 = sphi 0, %s27
      %s49 = sphi 0, %s51
      %s52 = sphi 0, %s49
      %s53 = sphi 0, %s52
      %s69 = sphi 0, %s53
    $region4: #{tpu_custom_call.1} parent=1 // loop_header_branch
      %16 = sbr.rel (%p14) target = $region8
    $region5: #{tpu_custom_call.1} parent=1 // loop_body
      %s18 = ssub.s32 %s13, 1
      %s19 = ssub.s32 %s13, 2
      %s20 = sadd.s32 %s13, 1
      %s21 = ssub.s32 %s13, %s20
      %p22 = scmp.eq.s32.totalorder %s21, 0
      %s24 = sadd.s32 %s23, 1
      %s25 = scalar_select %p22, %s23, %s24
      %p28 = pneg %p22
      %p29 = scmp.eq.s32.totalorder %s13, 1
      %p30 = por %p28, %p29
      %p31 = scmp.ne.s32.totalorder %s23, %s26
      %p32 = scmp.eq.s32.totalorder %s13, 0
      %p33 = por %p31, %p32
      %p34 = scmp.ne.s32.totalorder %s23, %s26
      %p35 = scmp.eq.s32.totalorder %s18, 1
      %p36 = por %p34, %p35
      %p37 = scmp.ne.s32.totalorder %s26, %s27
      %p38 = scmp.eq.s32.totalorder %s18, 0
      %p39 = por %p37, %p38
      %p40 = scmp.ne.s32.totalorder %s26, %s27
      %p41 = scmp.eq.s32.totalorder %s19, 1
      %p42 = por %p40, %p41
      %p44 = scmp.ne.s32.totalorder %s27, %s43
      %p45 = scmp.eq.s32.totalorder %s19, 0
      %p46 = por %p44, %p45
      %s47 = ssub.s32 %s13, %s20
      %p48 = scmp.eq.s32.totalorder %s47, 0
      %s50 = sadd.s32 %s49, 1
      %s51 = scalar_select %p48, %s49, %s50
      %p54 = pneg %p48
      %p55 = scmp.eq.s32.totalorder %s13, 1
      %p56 = por %p54, %p55
      %p57 = scmp.ne.s32.totalorder %s49, %s52
      %p58 = scmp.eq.s32.totalorder %s13, 0
      %p59 = por %p57, %p58
      %p60 = scmp.ne.s32.totalorder %s49, %s52
      %p61 = scmp.eq.s32.totalorder %s18, 1
      %p62 = por %p60, %p61
      %p63 = scmp.ne.s32.totalorder %s52, %s53
      %p64 = scmp.eq.s32.totalorder %s18, 0
      %p65 = por %p63, %p64
      %p66 = scmp.ne.s32.totalorder %s52, %s53
      %p67 = scmp.eq.s32.totalorder %s19, 1
      %p68 = por %p66, %p67
      %p70 = scmp.ne.s32.totalorder %s53, %s69
      %p71 = scmp.eq.s32.totalorder %s19, 0
      %p72 = por %p70, %p71
      %p73 = scmp.le.s32.totalorder 1, %s13
      %p74 = scmp.lt.s32.totalorder %s13, 3
      %p75 = pnand %p73, %p74
      %p76 = pneg %p75
      // Predicated region
      $region9: #{tpu_custom_call.1} parent=5 // pred_check
        _
      $region10: #{tpu_custom_call.1} parent=5 // pred_check_branch
        %78 = sbr.rel (%p75) target = $region12
      $region11: #{tpu_custom_call.1} parent=5 // pred_region
        %s79 = ssub.s32 %s13, 1
      $region12: #{tpu_custom_call.1} parent=5 // pred_fallthru
        _
      %p80 = scmp.lt.s32.totalorder %s13, 2
      // Predicated region
      $region13: #{tpu_custom_call.1} parent=5 // pred_check
        %p81 = pneg %p80
      $region14: #{tpu_custom_call.1} parent=5 // pred_check_branch
        %83 = sbr.rel (%p81) target = $region16
      $region15: #{tpu_custom_call.1} parent=5 // pred_region
        // Predicated region
        $region17: #{tpu_custom_call.1} parent=15 // pred_check
          %p84 = pneg %p33
        $region18: #{tpu_custom_call.1} parent=15 // pred_check_branch
          %86 = sbr.rel (%p84) target = $region20
        $region19: #{tpu_custom_call.1} parent=15 // pred_region
          %s87 = sand.u32 %s23, 1
          %s88 = scalar_lea.sflag [#allocation3], %s87
          %s89 = sand.u32 %s23, 1
          %s90 = smul.addr %s89, 16
          %s91 = scalar_lea.vmem [#allocation2], %s90
          %s92 = smul.u32 2, %s13
          %s94 = ssub.s32 256, 256
          %95 = vsyncadd %s88, %s94
          %s96 = smul.addr %s92, 128
          %s97 = scalar_lea.hbm %s0, %s96
          %s98 = sshll.u32 %s91, 4
          %s99 = int_to_ptr.vmem [resolvable:$true] %s98
          %104 = dma.hbm_to_vmem [thread:$0]  %s97, 256, %s99, %s88, 128, 128, 8
        $region20: #{tpu_custom_call.1} parent=15 // pred_fallthru
          _
      $region16: #{tpu_custom_call.1} parent=5 // pred_fallthru
        _
      %p105 = scmp.le.s32.totalorder 1, %s13
      %p106 = scmp.lt.s32.totalorder %s13, 3
      %p107 = pnand %p105, %p106
      %p108 = pneg %p107
      // Predicated region
      $region21: #{tpu_custom_call.1} parent=5 // pred_check
        _
      $region22: #{tpu_custom_call.1} parent=5 // pred_check_branch
        %110 = sbr.rel (%p107) target = $region24
      $region23: #{tpu_custom_call.1} parent=5 // pred_region
        %s111 = ssub.s32 %s13, 1
        %s112 = sand.u32 %s26, 1
        %s113 = scalar_lea.sflag [#allocation3], %s112
        %s114 = sand.u32 %s26, 1
        %s115 = smul.addr %s114, 16
        %s116 = scalar_lea.vmem [#allocation2], %s115
        // Predicated region
        $region25: #{tpu_custom_call.1} parent=23 // pred_check
          %p117 = pneg %p39
        $region26: #{tpu_custom_call.1} parent=23 // pred_check_branch
          %119 = sbr.rel (%p117) target = $region28
        $region27: #{tpu_custom_call.1} parent=23 // pred_region
          %120 = dma.done %s113, 256
        $region28: #{tpu_custom_call.1} parent=23 // pred_fallthru
          _
        %s121 = sand.u32 %s26, 1
        %s122 = scalar_lea.sflag [#allocation3], %s121
        %s123 = sand.u32 %s26, 1
        %s124 = smul.addr %s123, 16
        %s125 = scalar_lea.vmem [#allocation2], %s124
        %p126 = pneg %p39
        %p127 = pneg %p36
        %p128 = pneg %p65
        %p129 = pneg %p62
        %s130 = sand.u32 %s52, 1
        %s131 = scalar_lea.sflag [#allocation4], %s130
        %s132 = sand.u32 %s52, 1
        %s133 = smul.addr %s132, 16
        %s134 = scalar_lea.vmem [#allocation5], %s133
        %s135 = smul.u32 2, %s18
        %s136 = smul.u32 2, %s18
        %v137 = vld [vmem:[%s116] sm:$0xff]
        %v138 = vld [vmem:[%s116 + $0x8] sm:$0xff]
        %v139 = vrot.slane %v137, 4
        %v140 = vadd.f32 %v137, %v139
        %v141 = vrot.slane %v140, 2
        %v142 = vadd.f32 %v140, %v141
        %v143 = vrot.slane %v142, 1
        %v144 = vadd.f32 %v142, %v143
        %v145 = vrot.slane %v138, 4
        %v146 = vadd.f32 %v138, %v145
        %v147 = vrot.slane %v146, 2
        %v148 = vadd.f32 %v146, %v147
        %v149 = vrot.slane %v148, 1
        %v150 = vadd.f32 %v148, %v149
        %151 = vadd.xlane.f32.xlu0 %v144
        %v152 = vpop.xlane.xlu0 %151
        %153 = vadd.xlane.f32.xlu0 %v150
        %v154 = vpop.xlane.xlu0 %153
        %v155 = vrcp.pop 1024.0
        %v156 = vmul.f32 %v152, %v155
        %v157 = vmul.f32 %v154, %v155
        %v158 = vsub.f32 %v137, %v156
        %v159 = vsub.f32 %v138, %v157
        %v160 = vmul.f32 %v158, %v158
        %v161 = vmul.f32 %v159, %v159
        %v162 = vrot.slane %v160, 4
        %v163 = vadd.f32 %v160, %v162
        %v164 = vrot.slane %v163, 2
        %v165 = vadd.f32 %v163, %v164
        %v166 = vrot.slane %v165, 1
        %v167 = vadd.f32 %v165, %v166
        %v168 = vrot.slane %v161, 4
        %v169 = vadd.f32 %v161, %v168
        %v170 = vrot.slane %v169, 2
        %v171 = vadd.f32 %v169, %v170
        %v172 = vrot.slane %v171, 1
        %v173 = vadd.f32 %v171, %v172
        %174 = vadd.xlane.f32.xlu0 %v167
        %v175 = vpop.xlane.xlu0 %174
        %176 = vadd.xlane.f32.xlu0 %v173
        %v177 = vpop.xlane.xlu0 %176
        %v178 = vmul.f32 %v175, %v155
        %v179 = vmul.f32 %v177, %v155
        %v180 = vadd.f32 %v178, 1e-05
        %v181 = vadd.f32 %v179, 1e-05
        %v182 = vrsqrt.pop %v180
        %v183 = vrsqrt.pop %v181
        %v184 = vmul.f32 %v158, %v182
        %v185 = vmul.f32 %v159, %v183
        %186 = vst [vmem:[%s134] sm:$0xff] %v184
        %187 = vst [vmem:[%s134 + $0x8] sm:$0xff] %v185
        %s188 = sand.u32 %s52, 1
        %s189 = scalar_lea.sflag [#allocation4], %s188
        %s190 = sand.u32 %s52, 1
        %s191 = smul.addr %s190, 16
        %s192 = scalar_lea.vmem [#allocation5], %s191
        // Predicated region
        $region29: #{tpu_custom_call.1} parent=23 // pred_check
          %p193 = pneg %p62
        $region30: #{tpu_custom_call.1} parent=23 // pred_check_branch
          %195 = sbr.rel (%p193) target = $region32
        $region31: #{tpu_custom_call.1} parent=23 // pred_region
          %s196 = smul.u32 2, %s18
          %s198 = ssub.s32 256, 256
          %199 = vsyncadd %s189, %s198
          %s200 = smul.addr %s196, 128
          %s201 = scalar_lea.hbm %s1, %s200
          %s202 = sshll.u32 %s192, 4
          %s203 = int_to_ptr.vmem [resolvable:$true] %s202
          %208 = dma.vmem_to_hbm [thread:$0]  %s203, 256, %s201, %s189, 128, 128, 8
        $region32: #{tpu_custom_call.1} parent=23 // pred_fallthru
          _
      $region24: #{tpu_custom_call.1} parent=5 // pred_fallthru
        _
      %p209 = scmp.le.s32.totalorder 2, %s13
      // Predicated region
      $region33: #{tpu_custom_call.1} parent=5 // pred_check
        %p210 = pneg %p209
      $region34: #{tpu_custom_call.1} parent=5 // pred_check_branch
        %212 = sbr.rel (%p210) target = $region36
      $region35: #{tpu_custom_call.1} parent=5 // pred_region
        %s213 = ssub.s32 %s13, 2
        // Predicated region
        $region37: #{tpu_custom_call.1} parent=35 // pred_check
          %p214 = pneg %p68
        $region38: #{tpu_custom_call.1} parent=35 // pred_check_branch
          %216 = sbr.rel (%p214) target = $region40
        $region39: #{tpu_custom_call.1} parent=35 // pred_region
          %s217 = sand.u32 %s53, 1
          %s218 = scalar_lea.sflag [#allocation4], %s217
          %s219 = sand.u32 %s53, 1
          %s220 = smul.addr %s219, 16
          %s221 = scalar_lea.vmem [#allocation5], %s220
          %222 = dma.done %s218, 256
        $region40: #{tpu_custom_call.1} parent=35 // pred_fallthru
          _
      $region36: #{tpu_custom_call.1} parent=5 // pred_fallthru
        _
    $region6: #{tpu_custom_call.1} parent=1 // loop_footer
      %s17 = sadd.s32 1, %s13
    $region7: #{tpu_custom_call.1} parent=1 // loop_footer_branch
      %12 = sbr.rel target = $region3
    $region8: #{tpu_custom_call.1} parent=1 // loop_exit
      _
    %223 = vsyncpa [#allocation3], 1
    %s224 = scalar_lea.sflag [#allocation3], 1
    %225 = vsyncpa %s224, 1
    %226 = vsyncpa [#allocation4], 1
    %s227 = scalar_lea.sflag [#allocation4], 1
    %228 = vsyncpa %s227, 1

</llo_original>
